<compile_context>
chip_gen: v7x
topology: tpu7x:2x2x1
jax: 0.10.0
libtpu: 0.0.40
codegen_flags: <defaults>
</compile_context>

<pallas_src>
import jax
import jax.numpy as jnp
import jax.scipy.linalg as jsl
from jax.experimental import pallas as pl
from jax.experimental.pallas import tpu as pltpu

IN_CHANNEL = 4                 # small synthetic channel count (module's `in_channel`)
TARGET_BLOCK_BYTES = 1 << 20   # ~1 MiB per block (in + out, double-buffered ≈ 4 MiB)


# -------------------- parameter setup (plain JAX glue) --------------------

def init_params(key, c):
    """Deterministic re-implementation of InvConv2dLU.__init__ (no checkpoint)."""
    w_rand = jax.random.normal(key, (c, c), dtype=jnp.float32)
    w_init, _ = jnp.linalg.qr(w_rand)
    P, L, U = jsl.lu(w_init)                 # w_init = P @ L @ U
    l_mask = jnp.tril(jnp.ones((c, c), jnp.float32), -1)
    u_mask = jnp.triu(jnp.ones((c, c), jnp.float32), 1)
    eye = jnp.eye(c, dtype=jnp.float32)
    diag_U = jnp.diag(U)
    sign_U = jnp.sign(diag_U)
    log_U_diag = jnp.log(jnp.abs(diag_U) + 1e-6)
    return dict(P=P, L=L, U=U, l_mask=l_mask, u_mask=u_mask, eye=eye,
                sign_U=sign_U, log_U_diag=log_U_diag)


def calc_weight(p):
    """W = P @ (L*l_mask + I) @ (U*u_mask + diag(sign_U * exp(log_U_diag)))."""
    L = p["L"] * p["l_mask"] + p["eye"]
    U = p["U"] * p["u_mask"] + jnp.diag(p["sign_U"] * jnp.exp(p["log_U_diag"]))
    return p["P"] @ L @ U                    # (C, C)


# ------------------------------ Pallas kernel ------------------------------

def _inv_conv_kernel(x_ref, w_ref, o_ref):
    # x_ref / o_ref: (B_TILE, C, R_TILE, 128) f32 — fully packed (sublane, lane) tiles.
    # w_ref:         (C, C) f32 resident in SMEM — each term is scalar * full tile.
    x = x_ref[...]                               # (b, C, r, 128)
    C = x.shape[1]
    for o in range(C):                           # unrolled at trace time (C small, static)
        acc = w_ref[o, 0] * x[:, 0, :, :]
        for c in range(1, C):
            acc = acc + w_ref[o, c] * x[:, c, :, :]
        o_ref[:, o, :, :] = acc.astype(o_ref.dtype)


# ----------------------------- wrapper / tiling -----------------------------

def _round_up(n, m):
    return ((n + m - 1) // m) * m


def _choose_tiles(B, C, R, target_bytes=TARGET_BLOCK_BYTES):
    """Pick (b_tile, r_tile) so a block is ~target_bytes and divides the array."""
    bytes_per_row = C * 128 * 4                  # one r-slice, all channels, one batch
    per_batch = R * bytes_per_row
    if per_batch <= target_bytes:
        # Whole pixel axis in one block; fold as many batches as fit (divisor of B).
        b_tile = max(1, min(B, target_bytes // per_batch))
        while B % b_tile != 0:
            b_tile -= 1
        return b_tile, R
    # Per-batch slab too big: tile the R axis with a multiple-of-8 divisor of R.
    r_tile = max(8, (target_bytes // bytes_per_row) // 8 * 8)
    while r_tile > 8 and R % r_tile != 0:
        r_tile -= 8
    if R % r_tile != 0:
        r_tile = R                               # full-dim block is always legal
    return 1, r_tile


def inv_conv2d_lu_forward(x, params):
    """Forward pass of InvConv2dLU. x: (B, C, H, W) float32. Returns (out, logdet)."""
    B, C, H, Wsz = x.shape
    HW = H * Wsz
    W_mat = calc_weight(params)                  # (C, C) float32

    # NCHW -> (B, C, HW) -> (B, C, R, 128): pure row-major reshapes (no transpose).
    x3 = x.reshape(B, C, HW)
    HW_pad = HW
    if HW % 128 != 0:
        # TODO(synk): handle a ragged pixel tail with an in-kernel masked store
        # instead of this minimal pad + slice (extra HBM pass); not hit here.
        HW_pad = _round_up(HW, 128)
        x3 = jnp.pad(x3, ((0, 0), (0, 0), (0, HW_pad - HW)))
    R = HW_pad // 128
    x4 = x3.reshape(B, C, R, 128)

    b_tile, r_tile = _choose_tiles(B, C, R)
    grid = (B // b_tile, R // r_tile)

    out4 = pl.pallas_call(
        _inv_conv_kernel,
        out_shape=jax.ShapeDtypeStruct((B, C, R, 128), x.dtype),
        grid_spec=pltpu.PrefetchScalarGridSpec(
            num_scalar_prefetch=0,
            grid=grid,
            in_specs=[
                # x block: packed (b_tile, C, r_tile, 128) tile.
                pl.BlockSpec((b_tile, C, r_tile, 128),
                             lambda bi, ri: (bi, 0, ri, 0)),
                # (C, C) mixing weight: whole array resident in SMEM.
                pl.BlockSpec(memory_space=pltpu.MemorySpace.SMEM),
            ],
            out_specs=pl.BlockSpec((b_tile, C, r_tile, 128),
                                   lambda bi, ri: (bi, 0, ri, 0)),
        ),
        compiler_params=pltpu.CompilerParams(
            # Disjoint output blocks per grid point -> both axes parallel
            # (shards across both TensorCores on v7x; harmless on v5e/v6e).
            dimension_semantics=("parallel", "parallel"),
        ),
        cost_estimate=pl.CostEstimate(
            flops=2 * B * C * C * HW,
            transcendentals=0,
            bytes_accessed=2 * B * C * HW * 4,
        ),
    )(x4, W_mat)

    out = out4.reshape(B, C, HW_pad)
    if HW_pad != HW:
        out = out[:, :, :HW]
    out = out.reshape(B, C, H, Wsz)              # back to NCHW (pure reshape)

    # logdet is independent of x — plain JAX in the wrapper.
    logdet = jnp.float32(H * Wsz) * jnp.sum(params["log_U_diag"])
    return out, logdet


# ---------------------------------- main -----------------------------------

if __name__ == "__main__":
    key = jax.random.PRNGKey(0)
    k_param, k_x = jax.random.split(key)

    params = init_params(k_param, IN_CHANNEL)
    x = jax.random.normal(k_x, (2, IN_CHANNEL, 16, 16), dtype=jnp.float32)

    out, logdet = inv_conv2d_lu_forward(x, params)
    out, logdet = jax.block_until_ready((out, logdet))

    # Reference in plain JAX (F.conv2d with 1x1 kernel == channel einsum).
    W_ref = calc_weight(params)
    out_ref = jnp.einsum("oc,bchw->bohw", W_ref, x)
    logdet_ref = x.shape[2] * x.shape[3] * jnp.sum(params["log_U_diag"])

    assert out.shape == x.shape and out.dtype == x.dtype
    assert jnp.allclose(out, out_ref, atol=1e-5, rtol=1e-5)
    assert jnp.allclose(logdet, logdet_ref, atol=1e-5, rtol=1e-5)

    print("KERNEL_OK")
</pallas_src>

<mosaic_0001>
module attributes {stable_mosaic.version = 11 : i64} {
  func.func @_inv_conv_kernel(%arg0: i32, %arg1: i32, %arg2: memref<2x4x2x128xf32, #tpu.memory_space<vmem>>, %arg3: memref<4x4xf32, #tpu.memory_space<smem>>, %arg4: memref<2x4x2x128xf32, #tpu.memory_space<vmem>>) attributes {dimension_semantics = [#tpu.dimension_semantics<parallel>, #tpu.dimension_semantics<parallel>], iteration_bounds = array<i64: 1, 1>, scalar_prefetch = 0 : i64, scratch_operands = 0 : i64, tpu.core_type = #tpu.core_type<tc>, window_params = [{transform_indices = @transform_0, window_bounds = array<i64: 2, 4, 2, 128>}, {transform_indices = @transform_1, window_bounds = array<i64: 4, 4>}, {transform_indices = @transform_2, window_bounds = array<i64: 2, 4, 2, 128>}]} {
    %c0 = arith.constant 0 : index
    %c0_0 = arith.constant 0 : index
    %c0_1 = arith.constant 0 : index
    %c0_2 = arith.constant 0 : index
    %0 = vector.load %arg2[%c0, %c0_0, %c0_1, %c0_2] : memref<2x4x2x128xf32, #tpu.memory_space<vmem>>, vector<2x4x2x128xf32>
    %c0_3 = arith.constant 0 : index
    %c0_4 = arith.constant 0 : index
    %1 = memref.load %arg3[%c0_3, %c0_4] : memref<4x4xf32, #tpu.memory_space<smem>>
    %2 = vector.extract_strided_slice %0 {offsets = [0, 0, 0, 0], sizes = [2, 1, 2, 128], strides = [1, 1, 1, 1]} : vector<2x4x2x128xf32> to vector<2x1x2x128xf32>
    %3 = vector.shape_cast %2 : vector<2x1x2x128xf32> to vector<2x2x128xf32>
    %4 = vector.broadcast %1 : f32 to vector<2x2x128xf32>
    %5 = arith.mulf %4, %3 : vector<2x2x128xf32>
    %c0_5 = arith.constant 0 : index
    %c1 = arith.constant 1 : index
    %6 = memref.load %arg3[%c0_5, %c1] : memref<4x4xf32, #tpu.memory_space<smem>>
    %7 = vector.extract_strided_slice %0 {offsets = [0, 1, 0, 0], sizes = [2, 1, 2, 128], strides = [1, 1, 1, 1]} : vector<2x4x2x128xf32> to vector<2x1x2x128xf32>
    %8 = vector.shape_cast %7 : vector<2x1x2x128xf32> to vector<2x2x128xf32>
    %9 = vector.broadcast %6 : f32 to vector<2x2x128xf32>
    %10 = arith.mulf %9, %8 : vector<2x2x128xf32>
    %11 = arith.addf %5, %10 : vector<2x2x128xf32>
    %c0_6 = arith.constant 0 : index
    %c2 = arith.constant 2 : index
    %12 = memref.load %arg3[%c0_6, %c2] : memref<4x4xf32, #tpu.memory_space<smem>>
    %13 = vector.extract_strided_slice %0 {offsets = [0, 2, 0, 0], sizes = [2, 1, 2, 128], strides = [1, 1, 1, 1]} : vector<2x4x2x128xf32> to vector<2x1x2x128xf32>
    %14 = vector.shape_cast %13 : vector<2x1x2x128xf32> to vector<2x2x128xf32>
    %15 = vector.broadcast %12 : f32 to vector<2x2x128xf32>
    %16 = arith.mulf %15, %14 : vector<2x2x128xf32>
    %17 = arith.addf %11, %16 : vector<2x2x128xf32>
    %c0_7 = arith.constant 0 : index
    %c3 = arith.constant 3 : index
    %18 = memref.load %arg3[%c0_7, %c3] : memref<4x4xf32, #tpu.memory_space<smem>>
    %19 = vector.extract_strided_slice %0 {offsets = [0, 3, 0, 0], sizes = [2, 1, 2, 128], strides = [1, 1, 1, 1]} : vector<2x4x2x128xf32> to vector<2x1x2x128xf32>
    %20 = vector.shape_cast %19 : vector<2x1x2x128xf32> to vector<2x2x128xf32>
    %21 = vector.broadcast %18 : f32 to vector<2x2x128xf32>
    %22 = arith.mulf %21, %20 : vector<2x2x128xf32>
    %23 = arith.addf %17, %22 : vector<2x2x128xf32>
    %c0_8 = arith.constant 0 : index
    %c0_9 = arith.constant 0 : index
    %c0_10 = arith.constant 0 : index
    %c0_11 = arith.constant 0 : index
    %24 = vector.load %arg4[%c0_8, %c0_9, %c0_10, %c0_11] : memref<2x4x2x128xf32, #tpu.memory_space<vmem>>, vector<2x1x2x128xf32>
    %25 = vector.shape_cast %24 : vector<2x1x2x128xf32> to vector<2x2x128xf32>
    %26 = vector.shape_cast %23 : vector<2x2x128xf32> to vector<2x1x2x128xf32>
    tpu.vector_store %arg4[%c0_8, %c0_9, %c0_10, %c0_11], %26 {strides = array<i32>} : memref<2x4x2x128xf32, #tpu.memory_space<vmem>>, vector<2x1x2x128xf32>,
    %c1_12 = arith.constant 1 : index
    %c0_13 = arith.constant 0 : index
    %27 = memref.load %arg3[%c1_12, %c0_13] : memref<4x4xf32, #tpu.memory_space<smem>>
    %28 = vector.extract_strided_slice %0 {offsets = [0, 0, 0, 0], sizes = [2, 1, 2, 128], strides = [1, 1, 1, 1]} : vector<2x4x2x128xf32> to vector<2x1x2x128xf32>
    %29 = vector.shape_cast %28 : vector<2x1x2x128xf32> to vector<2x2x128xf32>
    %30 = vector.broadcast %27 : f32 to vector<2x2x128xf32>
    %31 = arith.mulf %30, %29 : vector<2x2x128xf32>
    %c1_14 = arith.constant 1 : index
    %c1_15 = arith.constant 1 : index
    %32 = memref.load %arg3[%c1_14, %c1_15] : memref<4x4xf32, #tpu.memory_space<smem>>
    %33 = vector.extract_strided_slice %0 {offsets = [0, 1, 0, 0], sizes = [2, 1, 2, 128], strides = [1, 1, 1, 1]} : vector<2x4x2x128xf32> to vector<2x1x2x128xf32>
    %34 = vector.shape_cast %33 : vector<2x1x2x128xf32> to vector<2x2x128xf32>
    %35 = vector.broadcast %32 : f32 to vector<2x2x128xf32>
    %36 = arith.mulf %35, %34 : vector<2x2x128xf32>
    %37 = arith.addf %31, %36 : vector<2x2x128xf32>
    %c1_16 = arith.constant 1 : index
    %c2_17 = arith.constant 2 : index
    %38 = memref.load %arg3[%c1_16, %c2_17] : memref<4x4xf32, #tpu.memory_space<smem>>
    %39 = vector.extract_strided_slice %0 {offsets = [0, 2, 0, 0], sizes = [2, 1, 2, 128], strides = [1, 1, 1, 1]} : vector<2x4x2x128xf32> to vector<2x1x2x128xf32>
    %40 = vector.shape_cast %39 : vector<2x1x2x128xf32> to vector<2x2x128xf32>
    %41 = vector.broadcast %38 : f32 to vector<2x2x128xf32>
    %42 = arith.mulf %41, %40 : vector<2x2x128xf32>
    %43 = arith.addf %37, %42 : vector<2x2x128xf32>
    %c1_18 = arith.constant 1 : index
    %c3_19 = arith.constant 3 : index
    %44 = memref.load %arg3[%c1_18, %c3_19] : memref<4x4xf32, #tpu.memory_space<smem>>
    %45 = vector.extract_strided_slice %0 {offsets = [0, 3, 0, 0], sizes = [2, 1, 2, 128], strides = [1, 1, 1, 1]} : vector<2x4x2x128xf32> to vector<2x1x2x128xf32>
    %46 = vector.shape_cast %45 : vector<2x1x2x128xf32> to vector<2x2x128xf32>
    %47 = vector.broadcast %44 : f32 to vector<2x2x128xf32>
    %48 = arith.mulf %47, %46 : vector<2x2x128xf32>
    %49 = arith.addf %43, %48 : vector<2x2x128xf32>
    %c0_20 = arith.constant 0 : index
    %c1_21 = arith.constant 1 : index
    %c0_22 = arith.constant 0 : index
    %c0_23 = arith.constant 0 : index
    %50 = vector.load %arg4[%c0_20, %c1_21, %c0_22, %c0_23] : memref<2x4x2x128xf32, #tpu.memory_space<vmem>>, vector<2x1x2x128xf32>
    %51 = vector.shape_cast %50 : vector<2x1x2x128xf32> to vector<2x2x128xf32>
    %52 = vector.shape_cast %49 : vector<2x2x128xf32> to vector<2x1x2x128xf32>
    tpu.vector_store %arg4[%c0_20, %c1_21, %c0_22, %c0_23], %52 {strides = array<i32>} : memref<2x4x2x128xf32, #tpu.memory_space<vmem>>, vector<2x1x2x128xf32>,
    %c2_24 = arith.constant 2 : index
    %c0_25 = arith.constant 0 : index
    %53 = memref.load %arg3[%c2_24, %c0_25] : memref<4x4xf32, #tpu.memory_space<smem>>
    %54 = vector.extract_strided_slice %0 {offsets = [0, 0, 0, 0], sizes = [2, 1, 2, 128], strides = [1, 1, 1, 1]} : vector<2x4x2x128xf32> to vector<2x1x2x128xf32>
    %55 = vector.shape_cast %54 : vector<2x1x2x128xf32> to vector<2x2x128xf32>
    %56 = vector.broadcast %53 : f32 to vector<2x2x128xf32>
    %57 = arith.mulf %56, %55 : vector<2x2x128xf32>
    %c2_26 = arith.constant 2 : index
    %c1_27 = arith.constant 1 : index
    %58 = memref.load %arg3[%c2_26, %c1_27] : memref<4x4xf32, #tpu.memory_space<smem>>
    %59 = vector.extract_strided_slice %0 {offsets = [0, 1, 0, 0], sizes = [2, 1, 2, 128], strides = [1, 1, 1, 1]} : vector<2x4x2x128xf32> to vector<2x1x2x128xf32>
    %60 = vector.shape_cast %59 : vector<2x1x2x128xf32> to vector<2x2x128xf32>
    %61 = vector.broadcast %58 : f32 to vector<2x2x128xf32>
    %62 = arith.mulf %61, %60 : vector<2x2x128xf32>
    %63 = arith.addf %57, %62 : vector<2x2x128xf32>
    %c2_28 = arith.constant 2 : index
    %c2_29 = arith.constant 2 : index
    %64 = memref.load %arg3[%c2_28, %c2_29] : memref<4x4xf32, #tpu.memory_space<smem>>
    %65 = vector.extract_strided_slice %0 {offsets = [0, 2, 0, 0], sizes = [2, 1, 2, 128], strides = [1, 1, 1, 1]} : vector<2x4x2x128xf32> to vector<2x1x2x128xf32>
    %66 = vector.shape_cast %65 : vector<2x1x2x128xf32> to vector<2x2x128xf32>
    %67 = vector.broadcast %64 : f32 to vector<2x2x128xf32>
    %68 = arith.mulf %67, %66 : vector<2x2x128xf32>
    %69 = arith.addf %63, %68 : vector<2x2x128xf32>
    %c2_30 = arith.constant 2 : index
    %c3_31 = arith.constant 3 : index
    %70 = memref.load %arg3[%c2_30, %c3_31] : memref<4x4xf32, #tpu.memory_space<smem>>
    %71 = vector.extract_strided_slice %0 {offsets = [0, 3, 0, 0], sizes = [2, 1, 2, 128], strides = [1, 1, 1, 1]} : vector<2x4x2x128xf32> to vector<2x1x2x128xf32>
    %72 = vector.shape_cast %71 : vector<2x1x2x128xf32> to vector<2x2x128xf32>
    %73 = vector.broadcast %70 : f32 to vector<2x2x128xf32>
    %74 = arith.mulf %73, %72 : vector<2x2x128xf32>
    %75 = arith.addf %69, %74 : vector<2x2x128xf32>
    %c0_32 = arith.constant 0 : index
    %c2_33 = arith.constant 2 : index
    %c0_34 = arith.constant 0 : index
    %c0_35 = arith.constant 0 : index
    %76 = vector.load %arg4[%c0_32, %c2_33, %c0_34, %c0_35] : memref<2x4x2x128xf32, #tpu.memory_space<vmem>>, vector<2x1x2x128xf32>
    %77 = vector.shape_cast %76 : vector<2x1x2x128xf32> to vector<2x2x128xf32>
    %78 = vector.shape_cast %75 : vector<2x2x128xf32> to vector<2x1x2x128xf32>
    tpu.vector_store %arg4[%c0_32, %c2_33, %c0_34, %c0_35], %78 {strides = array<i32>} : memref<2x4x2x128xf32, #tpu.memory_space<vmem>>, vector<2x1x2x128xf32>,
    %c3_36 = arith.constant 3 : index
    %c0_37 = arith.constant 0 : index
    %79 = memref.load %arg3[%c3_36, %c0_37] : memref<4x4xf32, #tpu.memory_space<smem>>
    %80 = vector.extract_strided_slice %0 {offsets = [0, 0, 0, 0], sizes = [2, 1, 2, 128], strides = [1, 1, 1, 1]} : vector<2x4x2x128xf32> to vector<2x1x2x128xf32>
    %81 = vector.shape_cast %80 : vector<2x1x2x128xf32> to vector<2x2x128xf32>
    %82 = vector.broadcast %79 : f32 to vector<2x2x128xf32>
    %83 = arith.mulf %82, %81 : vector<2x2x128xf32>
    %c3_38 = arith.constant 3 : index
    %c1_39 = arith.constant 1 : index
    %84 = memref.load %arg3[%c3_38, %c1_39] : memref<4x4xf32, #tpu.memory_space<smem>>
    %85 = vector.extract_strided_slice %0 {offsets = [0, 1, 0, 0], sizes = [2, 1, 2, 128], strides = [1, 1, 1, 1]} : vector<2x4x2x128xf32> to vector<2x1x2x128xf32>
    %86 = vector.shape_cast %85 : vector<2x1x2x128xf32> to vector<2x2x128xf32>
    %87 = vector.broadcast %84 : f32 to vector<2x2x128xf32>
    %88 = arith.mulf %87, %86 : vector<2x2x128xf32>
    %89 = arith.addf %83, %88 : vector<2x2x128xf32>
    %c3_40 = arith.constant 3 : index
    %c2_41 = arith.constant 2 : index
    %90 = memref.load %arg3[%c3_40, %c2_41] : memref<4x4xf32, #tpu.memory_space<smem>>
    %91 = vector.extract_strided_slice %0 {offsets = [0, 2, 0, 0], sizes = [2, 1, 2, 128], strides = [1, 1, 1, 1]} : vector<2x4x2x128xf32> to vector<2x1x2x128xf32>
    %92 = vector.shape_cast %91 : vector<2x1x2x128xf32> to vector<2x2x128xf32>
    %93 = vector.broadcast %90 : f32 to vector<2x2x128xf32>
    %94 = arith.mulf %93, %92 : vector<2x2x128xf32>
    %95 = arith.addf %89, %94 : vector<2x2x128xf32>
    %c3_42 = arith.constant 3 : index
    %c3_43 = arith.constant 3 : index
    %96 = memref.load %arg3[%c3_42, %c3_43] : memref<4x4xf32, #tpu.memory_space<smem>>
    %97 = vector.extract_strided_slice %0 {offsets = [0, 3, 0, 0], sizes = [2, 1, 2, 128], strides = [1, 1, 1, 1]} : vector<2x4x2x128xf32> to vector<2x1x2x128xf32>
    %98 = vector.shape_cast %97 : vector<2x1x2x128xf32> to vector<2x2x128xf32>
    %99 = vector.broadcast %96 : f32 to vector<2x2x128xf32>
    %100 = arith.mulf %99, %98 : vector<2x2x128xf32>
    %101 = arith.addf %95, %100 : vector<2x2x128xf32>
    %c0_44 = arith.constant 0 : index
    %c3_45 = arith.constant 3 : index
    %c0_46 = arith.constant 0 : index
    %c0_47 = arith.constant 0 : index
    %102 = vector.load %arg4[%c0_44, %c3_45, %c0_46, %c0_47] : memref<2x4x2x128xf32, #tpu.memory_space<vmem>>, vector<2x1x2x128xf32>
    %103 = vector.shape_cast %102 : vector<2x1x2x128xf32> to vector<2x2x128xf32>
    %104 = vector.shape_cast %101 : vector<2x2x128xf32> to vector<2x1x2x128xf32>
    tpu.vector_store %arg4[%c0_44, %c3_45, %c0_46, %c0_47], %104 {strides = array<i32>} : memref<2x4x2x128xf32, #tpu.memory_space<vmem>>, vector<2x1x2x128xf32>,
    return
  }
  func.func @transform_0(%arg0: i32, %arg1: i32) -> (i32, i32, i32, i32) {
    %c0_i32 = arith.constant 0 : i32
    %c0_i32_0 = arith.constant 0 : i32
    %c0_i32_1 = arith.constant 0 : i32
    return %arg0, %c0_i32, %arg1, %c0_i32_0 : i32, i32, i32, i32
  }
  func.func @transform_1(%arg0: i32, %arg1: i32) -> (i32, i32) {
    %c0_i32 = arith.constant 0 : i32
    %c0_i32_0 = arith.constant 0 : i32
    %c0_i32_1 = arith.constant 0 : i32
    return %c0_i32, %c0_i32_0 : i32, i32
  }
  func.func @transform_2(%arg0: i32, %arg1: i32) -> (i32, i32, i32, i32) {
    %c0_i32 = arith.constant 0 : i32
    %c0_i32_0 = arith.constant 0 : i32
    %c0_i32_1 = arith.constant 0 : i32
    return %arg0, %c0_i32, %arg1, %c0_i32_0 : i32, i32, i32, i32
  }
}

</mosaic_0001>

<llo_original>
// kernel: tpu_custom_call.1
$region0: #{tpu_custom_call.1}
  #allocation0 [shape = 'u32[]', space=smem, size = 0x4, offset = 0x4, fixed_abs, tag = 'smem constant byte address 0x4 - core index']
  #allocation1 [shape = 'u32[144,128]{1,0:T(1,128)}', space=vmem, size = 0x12000, scoped, tag = 'internal scratch']
  %s0 = inlined_call_operand.hbm [shape: f32[2,4,2,128], index: 0, kind: input, shape index: {}]
  %s1 = inlined_call_operand.hbm [shape: f32[4,4], index: 1, kind: input, shape index: {}]
  %s2 = inlined_call_operand.hbm [shape: f32[2,4,2,128], index: 2, kind: output, shape index: {}]
  %s3 = sld [smem:[#allocation0]]
  $region26: #{tpu_custom_call.1} parent=0
    _
  %s5 = ssub.s32 1, %s3
  %s6 = scalar_select 0, %s5, %s3
  $region1: #{tpu_custom_call.1} parent=0
    #allocation2 [shape = 'u8[8192]{0}', space=vmem, size = 0x2000, scoped, tag = 'input window, operand 0, single buffered']
    #allocation3 [shape = 's32[1]{0}', space=sflag, size = 0x4, scoped, tag = 'scoped memory for tpu_custom_call.1']
    #allocation4 [shape = 's32[1]{0}', space=sflag, size = 0x4, scoped, tag = 'scoped memory for tpu_custom_call.1']
    #allocation5 [shape = 's32[1]{0}', space=sflag, size = 0x4, scoped, tag = 'scoped memory for tpu_custom_call.1']
    #allocation6 [shape = 'u8[2048]{0}', space=smem, size = 0x800, scoped, tag = 'input window, operand 1, single buffered']
    #allocation7 [shape = 'u8[8192]{0}', space=vmem, size = 0x2000, scoped, tag = 'output window, operand 0, single buffered']
    %7 = vsyncpa [#allocation3], 0
    %8 = vsyncpa [#allocation5], 0
    %9 = vsyncpa [#allocation4], 0
    // Predicated region
    $region2: #{tpu_custom_call.1} parent=1 // pred_check
      _
    $region3: #{tpu_custom_call.1} parent=1 // pred_check_branch
      %11 = sbr.rel (0) target = $region5
    $region4: #{tpu_custom_call.1} parent=1 // pred_region
      %s13 = ssub.s32 256, 256
      %14 = vsyncadd [#allocation3], %s13
      %s15 = sshll.u32 [#allocation2], 4
      %s16 = int_to_ptr.vmem [resolvable:$true] %s15
      %21 = dma.hbm_to_vmem [thread:$0]  %s0, 256, %s16, [#allocation3], 32, 32, 2
    $region5: #{tpu_custom_call.1} parent=1 // pred_fallthru
      _
    // Predicated region
    $region6: #{tpu_custom_call.1} parent=1 // pred_check
      _
    $region7: #{tpu_custom_call.1} parent=1 // pred_check_branch
      %23 = sbr.rel (0) target = $region9
    $region8: #{tpu_custom_call.1} parent=1 // pred_region
      %s25 = ssub.s32 64, 64
      %26 = vsyncadd [#allocation5], %s25
      %29 = dma.hbm_to_smem %s1, 64, [#allocation6], [#allocation5]
    $region9: #{tpu_custom_call.1} parent=1 // pred_fallthru
      _
    // Predicated region
    $region10: #{tpu_custom_call.1} parent=1 // pred_check
      _
    $region11: #{tpu_custom_call.1} parent=1 // pred_check_branch
      %31 = sbr.rel (0) target = $region13
    $region12: #{tpu_custom_call.1} parent=1 // pred_region
      %32 = dma.done [#allocation3], 256
    $region13: #{tpu_custom_call.1} parent=1 // pred_fallthru
      _
    // Predicated region
    $region14: #{tpu_custom_call.1} parent=1 // pred_check
      _
    $region15: #{tpu_custom_call.1} parent=1 // pred_check_branch
      %34 = sbr.rel (0) target = $region17
    $region16: #{tpu_custom_call.1} parent=1 // pred_region
      %35 = dma.done [#allocation5], 64
    $region17: #{tpu_custom_call.1} parent=1 // pred_fallthru
      _
    %36 = sfence
    %v37 = vld [vmem:[#allocation2] sm:$0x3]
    %v38 = vld [vmem:[#allocation2 + $0x2] sm:$0x3]
    %v39 = vld [vmem:[#allocation2 + $0x4] sm:$0x3]
    %v40 = vld [vmem:[#allocation2 + $0x6] sm:$0x3]
    %v41 = vld [vmem:[#allocation2 + $0x8] sm:$0x3]
    %v42 = vld [vmem:[#allocation2 + $0xa] sm:$0x3]
    %v43 = vld [vmem:[#allocation2 + $0xc] sm:$0x3]
    %v44 = vld [vmem:[#allocation2 + $0xe] sm:$0x3]
    %s45 = sld [smem:[#allocation6]]
    %v46 = vstv %s45
    %v47 = vmul.f32 %v46, %v37
    %v48 = vmul.f32 %v46, %v41
    %s49 = sld [smem:[#allocation6 + $0x1]]
    %v50 = vstv %s49
    %v51 = vmul.f32 %v50, %v38
    %v52 = vmul.f32 %v50, %v42
    %v53 = vadd.f32 %v47, %v51
    %v54 = vadd.f32 %v48, %v52
    %s55 = sld [smem:[#allocation6 + $0x2]]
    %v56 = vstv %s55
    %v57 = vmul.f32 %v56, %v39
    %v58 = vmul.f32 %v56, %v43
    %v59 = vadd.f32 %v53, %v57
    %v60 = vadd.f32 %v54, %v58
    %s61 = sld [smem:[#allocation6 + $0x3]]
    %v62 = vstv %s61
    %v63 = vmul.f32 %v62, %v40
    %v64 = vmul.f32 %v62, %v44
    %v65 = vadd.f32 %v59, %v63
    %v66 = vadd.f32 %v60, %v64
    %67 = vst [vmem:[#allocation7] sm:$0x3] %v65
    %68 = vst [vmem:[#allocation7 + $0x8] sm:$0x3] %v66
    %s69 = sld [smem:[#allocation6 + $0x80]]
    %v70 = vstv %s69
    %v71 = vmul.f32 %v70, %v37
    %v72 = vmul.f32 %v70, %v41
    %s73 = sld [smem:[#allocation6 + $0x81]]
    %v74 = vstv %s73
    %v75 = vmul.f32 %v74, %v38
    %v76 = vmul.f32 %v74, %v42
    %v77 = vadd.f32 %v71, %v75
    %v78 = vadd.f32 %v72, %v76
    %s79 = sld [smem:[#allocation6 + $0x82]]
    %v80 = vstv %s79
    %v81 = vmul.f32 %v80, %v39
    %v82 = vmul.f32 %v80, %v43
    %v83 = vadd.f32 %v77, %v81
    %v84 = vadd.f32 %v78, %v82
    %s85 = sld [smem:[#allocation6 + $0x83]]
    %v86 = vstv %s85
    %v87 = vmul.f32 %v86, %v40
    %v88 = vmul.f32 %v86, %v44
    %v89 = vadd.f32 %v83, %v87
    %v90 = vadd.f32 %v84, %v88
    %s91 = scalar_lea.vmem [#allocation7], 2
    %92 = vst [vmem:[%s91] sm:$0x3] %v89
    %93 = vst [vmem:[%s91 + $0x8] sm:$0x3] %v90
    %s94 = sld [smem:[#allocation6 + $0x100]]
    %v95 = vstv %s94
    %v96 = vmul.f32 %v95, %v37
    %v97 = vmul.f32 %v95, %v41
    %s98 = sld [smem:[#allocation6 + $0x101]]
    %v99 = vstv %s98
    %v100 = vmul.f32 %v99, %v38
    %v101 = vmul.f32 %v99, %v42
    %v102 = vadd.f32 %v96, %v100
    %v103 = vadd.f32 %v97, %v101
    %s104 = sld [smem:[#allocation6 + $0x102]]
    %v105 = vstv %s104
    %v106 = vmul.f32 %v105, %v39
    %v107 = vmul.f32 %v105, %v43
    %v108 = vadd.f32 %v102, %v106
    %v109 = vadd.f32 %v103, %v107
    %s110 = sld [smem:[#allocation6 + $0x103]]
    %v111 = vstv %s110
    %v112 = vmul.f32 %v111, %v40
    %v113 = vmul.f32 %v111, %v44
    %v114 = vadd.f32 %v108, %v112
    %v115 = vadd.f32 %v109, %v113
    %s116 = scalar_lea.vmem [#allocation7], 4
    %117 = vst [vmem:[%s116] sm:$0x3] %v114
    %118 = vst [vmem:[%s116 + $0x8] sm:$0x3] %v115
    %s119 = sld [smem:[#allocation6 + $0x180]]
    %v120 = vstv %s119
    %v121 = vmul.f32 %v120, %v37
    %v122 = vmul.f32 %v120, %v41
    %s123 = sld [smem:[#allocation6 + $0x181]]
    %v124 = vstv %s123
    %v125 = vmul.f32 %v124, %v38
    %v126 = vmul.f32 %v124, %v42
    %v127 = vadd.f32 %v121, %v125
    %v128 = vadd.f32 %v122, %v126
    %s129 = sld [smem:[#allocation6 + $0x182]]
    %v130 = vstv %s129
    %v131 = vmul.f32 %v130, %v39
    %v132 = vmul.f32 %v130, %v43
    %v133 = vadd.f32 %v127, %v131
    %v134 = vadd.f32 %v128, %v132
    %s135 = sld [smem:[#allocation6 + $0x183]]
    %v136 = vstv %s135
    %v137 = vmul.f32 %v136, %v40
    %v138 = vmul.f32 %v136, %v44
    %v139 = vadd.f32 %v133, %v137
    %v140 = vadd.f32 %v134, %v138
    %s141 = scalar_lea.vmem [#allocation7], 6
    %142 = vst [vmem:[%s141] sm:$0x3] %v139
    %143 = vst [vmem:[%s141 + $0x8] sm:$0x3] %v140
    // Predicated region
    $region18: #{tpu_custom_call.1} parent=1 // pred_check
      _
    $region19: #{tpu_custom_call.1} parent=1 // pred_check_branch
      %145 = sbr.rel (0) target = $region21
    $region20: #{tpu_custom_call.1} parent=1 // pred_region
      %s147 = ssub.s32 256, 256
      %148 = vsyncadd [#allocation4], %s147
      %s149 = sshll.u32 [#allocation7], 4
      %s150 = int_to_ptr.vmem [resolvable:$true] %s149
      %155 = dma.vmem_to_hbm [thread:$0]  %s150, 256, %s2, [#allocation4], 32, 32, 2
    $region21: #{tpu_custom_call.1} parent=1 // pred_fallthru
      _
    // Predicated region
    $region22: #{tpu_custom_call.1} parent=1 // pred_check
      _
    $region23: #{tpu_custom_call.1} parent=1 // pred_check_branch
      %157 = sbr.rel (0) target = $region25
    $region24: #{tpu_custom_call.1} parent=1 // pred_region
      %158 = dma.done [#allocation4], 256
    $region25: #{tpu_custom_call.1} parent=1 // pred_fallthru
      _
    %159 = vsyncpa [#allocation3], 1
    %160 = vsyncpa [#allocation4], 1
    %161 = vsyncpa [#allocation5], 1

</llo_original>
